<compile_context>
chip_gen: v6e
topology: v6e:2x2x1
jax: 0.10.0
libtpu: 0.0.40
codegen_flags: <defaults>
</compile_context>

<pallas_src>
import functools

import jax
import jax.numpy as jnp
from jax.experimental import pallas as pl
from jax.experimental.pallas import tpu as pltpu

NEG_SLOPE = 0.01  # nn.LeakyReLU() default negative_slope
LANE = 128
SUBLANE = 8


def _round_up(x, m):
    return ((x + m - 1) // m) * m


def _fc_generator_kernel(num_linear, use_bf16_matmul, *refs):
    """Whole MLP chain in one kernel.

    refs = (z_ref, w0, b0, w1, b1, ..., w{L-1}, b{L-1}, out_ref)
    Layer 0       : fc_latent2flatten (no activation, per forward()).
    Layers 1..L-2 : Linear + LeakyReLU (decoder fc blocks).
    Layer  L-1    : final Linear (no activation).
    Then Tanh (out_fn) on the result.
    """
    z_ref = refs[0]
    out_ref = refs[-1]
    params = refs[1:-1]

    x = z_ref[...]
    if x.dtype != jnp.float32:
        x = x.astype(jnp.float32)

    for li in range(num_linear):
        w = params[2 * li][...]
        b = params[2 * li + 1][...]          # (1, dout_pad) -> broadcasts over batch rows
        if use_bf16_matmul:
            # bf16 operands feed the MXU natively on v6e/v7x; accumulate in f32.
            acc = jnp.dot(x.astype(jnp.bfloat16), w.astype(jnp.bfloat16),
                          preferred_element_type=jnp.float32)
        else:
            acc = jnp.dot(x, w, preferred_element_type=jnp.float32)
        x = acc + b                          # bias add in f32 (VPU)
        if 1 <= li <= num_linear - 2:
            # LeakyReLU(0.01) on the VPU
            x = jnp.where(x > 0, x, NEG_SLOPE * x)

    # out_fn = Tanh (EUP)
    out_ref[...] = jnp.tanh(x).astype(out_ref.dtype)


def fc_generator_forward(z, weights, biases, *, block_b=None, use_bf16_matmul=False):
    """Pallas forward.

    Pads feature dims to 128-lane multiples and the batch to a multiple of the batch tile,
    runs the whole MLP in one kernel (weights resident full-size), then slices the padding off.
    """
    B, latent_dim = z.shape
    num_linear = len(weights)
    out_dim = weights[-1].shape[1]

    # Real and lane-padded layer widths: [latent, emb, *hidden, out]
    dims = [latent_dim] + [w.shape[1] for w in weights]
    dims_pad = [_round_up(d, LANE) for d in dims]
    in_pad, out_pad = dims_pad[0], dims_pad[-1]

    # Batch tile: one grid step for small B, 256-row tiles for large B (vreg-pressure cap).
    if block_b is None:
        block_b = min(_round_up(B, SUBLANE), 256)
    else:
        block_b = _round_up(block_b, SUBLANE)
    B_pad = _round_up(B, block_b)

    f32 = jnp.float32

    # Zero-pad z (padded feature columns and batch rows contribute nothing / are sliced off).
    z_p = jnp.zeros((B_pad, in_pad), f32).at[:B, :latent_dim].set(z.astype(f32))

    args = [z_p]
    in_specs = [pl.BlockSpec((block_b, in_pad), lambda i: (i, 0))]
    for li, (w, b) in enumerate(zip(weights, biases)):
        din_p, dout_p = dims_pad[li], dims_pad[li + 1]
        # Zero padding of weights AND biases keeps padded output columns exactly 0,
        # which LeakyReLU and tanh map back to 0, so padding never leaks into real columns.
        w_p = jnp.zeros((din_p, dout_p), f32).at[: w.shape[0], : w.shape[1]].set(w.astype(f32))
        b_p = jnp.zeros((1, dout_p), f32).at[0, : b.shape[0]].set(b.astype(f32))
        args += [w_p, b_p]
        # Grid-invariant operands: constant index_map -> fetched once, kept resident.
        in_specs.append(pl.BlockSpec((din_p, dout_p), lambda i: (0, 0)))
        in_specs.append(pl.BlockSpec((1, dout_p), lambda i: (0, 0)))

    out_specs = pl.BlockSpec((block_b, out_pad), lambda i: (i, 0))

    # Explicit VMEM budget: double-buffered tiles + resident weights/biases + largest live
    # intermediate, with 2x headroom. Capped at 64 MiB so the tiling is valid on v7x too.
    est = 2 * 4 * block_b * (in_pad + out_pad + max(dims_pad))
    for din_p, dout_p in zip(dims_pad[:-1], dims_pad[1:]):
        est += 2 * 4 * (din_p * dout_p + dout_p)
    vmem_limit = int(min(max(2 * est, 32 * 2**20), 64 * 2**20))

    kernel = functools.partial(_fc_generator_kernel, num_linear, use_bf16_matmul)

    out_p = pl.pallas_call(
        kernel,
        out_shape=jax.ShapeDtypeStruct((B_pad, out_pad), z.dtype),
        grid=(B_pad // block_b,),
        in_specs=in_specs,
        out_specs=out_specs,
        compiler_params=pltpu.CompilerParams(
            dimension_semantics=("parallel",),
            vmem_limit_bytes=vmem_limit,
        ),
    )(*args)

    # Slice off batch and lane padding.
    return out_p[:B, :out_dim]


def init_params(key, latent_dim, latent_emb_dim, dec_hidden_dims, out_dim):
    """Deterministic init mimicking nn.Linear's U(-1/sqrt(fan_in), 1/sqrt(fan_in))."""
    dims = [latent_dim, latent_emb_dim, *dec_hidden_dims, out_dim]
    weights, biases = [], []
    for din, dout in zip(dims[:-1], dims[1:]):
        key, kw, kb = jax.random.split(key, 3)
        bound = 1.0 / float(jnp.sqrt(jnp.float32(din)))
        weights.append(jax.random.uniform(kw, (din, dout), jnp.float32, -bound, bound))
        biases.append(jax.random.uniform(kb, (dout,), jnp.float32, -bound, bound))
    return weights, biases


def reference_forward(z, weights, biases):
    """Pure-JAX reference with identical semantics (for correctness check)."""
    num_linear = len(weights)
    x = z
    for li, (w, b) in enumerate(zip(weights, biases)):
        x = x @ w + b
        if 1 <= li <= num_linear - 2:
            x = jnp.where(x > 0, x, NEG_SLOPE * x)
    return jnp.tanh(x)


if __name__ == "__main__":
    # Small config consistent with the module:
    #   latent_dim=16, latent_emb_dim=32, dec_hidden_dims=[32, 64], in_shape=(16, 16) -> out_dim=16
    latent_dim = 16
    latent_emb_dim = 32
    dec_hidden_dims = [32, 64]
    in_shape = (16, 16)        # (H, W) -> data_dim == 2 path, out_dim = W = 16
    out_dim = in_shape[-1]
    B = 16

    key = jax.random.PRNGKey(0)
    key, kz = jax.random.split(key)
    z = jax.random.normal(kz, (B, latent_dim), jnp.float32)

    weights, biases = init_params(key, latent_dim, latent_emb_dim, dec_hidden_dims, out_dim)

    # Single grid step (block_b == B), lane-padded to 128, f32 matmuls (exact vs. reference).
    x_gen = fc_generator_forward(z, weights, biases)
    x_gen = jax.block_until_ready(x_gen)

    x_ref = reference_forward(z, weights, biases)
    assert x_gen.shape == (B, out_dim)
    assert jnp.allclose(x_gen, x_ref, atol=1e-5, rtol=1e-5)

    print("KERNEL_OK")
</pallas_src>

<mosaic_0001>
module attributes {stable_mosaic.version = 11 : i64} {
  func.func @_fc_generator_kernel(%arg0: i32, %arg1: memref<16x128xf32, #tpu.memory_space<vmem>>, %arg2: memref<128x128xf32, #tpu.memory_space<vmem>>, %arg3: memref<1x128xf32, #tpu.memory_space<vmem>>, %arg4: memref<128x128xf32, #tpu.memory_space<vmem>>, %arg5: memref<1x128xf32, #tpu.memory_space<vmem>>, %arg6: memref<128x128xf32, #tpu.memory_space<vmem>>, %arg7: memref<1x128xf32, #tpu.memory_space<vmem>>, %arg8: memref<128x128xf32, #tpu.memory_space<vmem>>, %arg9: memref<1x128xf32, #tpu.memory_space<vmem>>, %arg10: memref<16x128xf32, #tpu.memory_space<vmem>>) attributes {dimension_semantics = [#tpu.dimension_semantics<parallel>], iteration_bounds = array<i64: 1>, scalar_prefetch = 0 : i64, scratch_operands = 0 : i64, tpu.core_type = #tpu.core_type<tc>, window_params = [{transform_indices = @transform_0, window_bounds = array<i64: 16, 128>}, {pipeline_mode = #tpu.pipeline_mode<synchronous>, transform_indices = @transform_1, window_bounds = array<i64: 128, 128>}, {pipeline_mode = #tpu.pipeline_mode<synchronous>, transform_indices = @transform_2, window_bounds = array<i64: 1, 128>}, {pipeline_mode = #tpu.pipeline_mode<synchronous>, transform_indices = @transform_3, window_bounds = array<i64: 128, 128>}, {pipeline_mode = #tpu.pipeline_mode<synchronous>, transform_indices = @transform_4, window_bounds = array<i64: 1, 128>}, {pipeline_mode = #tpu.pipeline_mode<synchronous>, transform_indices = @transform_5, window_bounds = array<i64: 128, 128>}, {pipeline_mode = #tpu.pipeline_mode<synchronous>, transform_indices = @transform_6, window_bounds = array<i64: 1, 128>}, {pipeline_mode = #tpu.pipeline_mode<synchronous>, transform_indices = @transform_7, window_bounds = array<i64: 128, 128>}, {pipeline_mode = #tpu.pipeline_mode<synchronous>, transform_indices = @transform_8, window_bounds = array<i64: 1, 128>}, {transform_indices = @transform_9, window_bounds = array<i64: 16, 128>}]} {
    %c0 = arith.constant 0 : index
    %c0_0 = arith.constant 0 : index
    %0 = vector.load %arg1[%c0, %c0_0] : memref<16x128xf32, #tpu.memory_space<vmem>>, vector<16x128xf32>
    %c0_1 = arith.constant 0 : index
    %c0_2 = arith.constant 0 : index
    %1 = vector.load %arg2[%c0_1, %c0_2] : memref<128x128xf32, #tpu.memory_space<vmem>>, vector<128x128xf32>
    %c0_3 = arith.constant 0 : index
    %c0_4 = arith.constant 0 : index
    %2 = vector.load %arg3[%c0_3, %c0_4] : memref<1x128xf32, #tpu.memory_space<vmem>>, vector<1x128xf32>
    %cst = arith.constant dense<0.000000e+00> : vector<16x128xf32>
    %3 = tpu.matmul %0, %1, %cst {dimension_numbers = #tpu.dot_dimension_numbers<[1], [0], [0], [1], [0, 0, 1, 1], [], []>} : vector<16x128xf32>, vector<128x128xf32>, vector<16x128xf32> -> vector<16x128xf32>
    %4 = vector.broadcast %2 : vector<1x128xf32> to vector<16x128xf32>
    %5 = arith.addf %3, %4 : vector<16x128xf32>
    %c0_5 = arith.constant 0 : index
    %c0_6 = arith.constant 0 : index
    %6 = vector.load %arg4[%c0_5, %c0_6] : memref<128x128xf32, #tpu.memory_space<vmem>>, vector<128x128xf32>
    %c0_7 = arith.constant 0 : index
    %c0_8 = arith.constant 0 : index
    %7 = vector.load %arg5[%c0_7, %c0_8] : memref<1x128xf32, #tpu.memory_space<vmem>>, vector<1x128xf32>
    %cst_9 = arith.constant dense<0.000000e+00> : vector<16x128xf32>
    %8 = tpu.matmul %5, %6, %cst_9 {dimension_numbers = #tpu.dot_dimension_numbers<[1], [0], [0], [1], [0, 0, 1, 1], [], []>} : vector<16x128xf32>, vector<128x128xf32>, vector<16x128xf32> -> vector<16x128xf32>
    %9 = vector.broadcast %7 : vector<1x128xf32> to vector<16x128xf32>
    %10 = arith.addf %8, %9 : vector<16x128xf32>
    %cst_10 = arith.constant 0.000000e+00 : f32
    %11 = vector.broadcast %cst_10 : f32 to vector<16x128xf32>
    %12 = arith.cmpf ogt, %10, %11 : vector<16x128xf32>
    %cst_11 = arith.constant 0.00999999977 : f32
    %13 = vector.broadcast %cst_11 : f32 to vector<16x128xf32>
    %14 = arith.mulf %13, %10 : vector<16x128xf32>
    %15 = arith.select %12, %10, %14 : vector<16x128xi1>, vector<16x128xf32>
    %c0_12 = arith.constant 0 : index
    %c0_13 = arith.constant 0 : index
    %16 = vector.load %arg6[%c0_12, %c0_13] : memref<128x128xf32, #tpu.memory_space<vmem>>, vector<128x128xf32>
    %c0_14 = arith.constant 0 : index
    %c0_15 = arith.constant 0 : index
    %17 = vector.load %arg7[%c0_14, %c0_15] : memref<1x128xf32, #tpu.memory_space<vmem>>, vector<1x128xf32>
    %cst_16 = arith.constant dense<0.000000e+00> : vector<16x128xf32>
    %18 = tpu.matmul %15, %16, %cst_16 {dimension_numbers = #tpu.dot_dimension_numbers<[1], [0], [0], [1], [0, 0, 1, 1], [], []>} : vector<16x128xf32>, vector<128x128xf32>, vector<16x128xf32> -> vector<16x128xf32>
    %19 = vector.broadcast %17 : vector<1x128xf32> to vector<16x128xf32>
    %20 = arith.addf %18, %19 : vector<16x128xf32>
    %cst_17 = arith.constant 0.000000e+00 : f32
    %21 = vector.broadcast %cst_17 : f32 to vector<16x128xf32>
    %22 = arith.cmpf ogt, %20, %21 : vector<16x128xf32>
    %cst_18 = arith.constant 0.00999999977 : f32
    %23 = vector.broadcast %cst_18 : f32 to vector<16x128xf32>
    %24 = arith.mulf %23, %20 : vector<16x128xf32>
    %25 = arith.select %22, %20, %24 : vector<16x128xi1>, vector<16x128xf32>
    %c0_19 = arith.constant 0 : index
    %c0_20 = arith.constant 0 : index
    %26 = vector.load %arg8[%c0_19, %c0_20] : memref<128x128xf32, #tpu.memory_space<vmem>>, vector<128x128xf32>
    %c0_21 = arith.constant 0 : index
    %c0_22 = arith.constant 0 : index
    %27 = vector.load %arg9[%c0_21, %c0_22] : memref<1x128xf32, #tpu.memory_space<vmem>>, vector<1x128xf32>
    %cst_23 = arith.constant dense<0.000000e+00> : vector<16x128xf32>
    %28 = tpu.matmul %25, %26, %cst_23 {dimension_numbers = #tpu.dot_dimension_numbers<[1], [0], [0], [1], [0, 0, 1, 1], [], []>} : vector<16x128xf32>, vector<128x128xf32>, vector<16x128xf32> -> vector<16x128xf32>
    %29 = vector.broadcast %27 : vector<1x128xf32> to vector<16x128xf32>
    %30 = arith.addf %28, %29 : vector<16x128xf32>
    %31 = math.tanh %30 : vector<16x128xf32>
    %c0_24 = arith.constant 0 : index
    %c0_25 = arith.constant 0 : index
    %32 = vector.load %arg10[%c0_24, %c0_25] : memref<16x128xf32, #tpu.memory_space<vmem>>, vector<16x128xf32>
    tpu.vector_store %arg10[%c0_24, %c0_25], %31 {strides = array<i32>} : memref<16x128xf32, #tpu.memory_space<vmem>>, vector<16x128xf32>,
    return
  }
  func.func @transform_0(%arg0: i32) -> (i32, i32) {
    %c0_i32 = arith.constant 0 : i32
    %c0_i32_0 = arith.constant 0 : i32
    return %arg0, %c0_i32 : i32, i32
  }
  func.func @transform_1(%arg0: i32) -> (i32, i32) {
    %c0_i32 = arith.constant 0 : i32
    %c0_i32_0 = arith.constant 0 : i32
    %c0_i32_1 = arith.constant 0 : i32
    return %c0_i32, %c0_i32_0 : i32, i32
  }
  func.func @transform_2(%arg0: i32) -> (i32, i32) {
    %c0_i32 = arith.constant 0 : i32
    %c0_i32_0 = arith.constant 0 : i32
    %c0_i32_1 = arith.constant 0 : i32
    return %c0_i32, %c0_i32_0 : i32, i32
  }
  func.func @transform_3(%arg0: i32) -> (i32, i32) {
    %c0_i32 = arith.constant 0 : i32
    %c0_i32_0 = arith.constant 0 : i32
    %c0_i32_1 = arith.constant 0 : i32
    return %c0_i32, %c0_i32_0 : i32, i32
  }
  func.func @transform_4(%arg0: i32) -> (i32, i32) {
    %c0_i32 = arith.constant 0 : i32
    %c0_i32_0 = arith.constant 0 : i32
    %c0_i32_1 = arith.constant 0 : i32
    return %c0_i32, %c0_i32_0 : i32, i32
  }
  func.func @transform_5(%arg0: i32) -> (i32, i32) {
    %c0_i32 = arith.constant 0 : i32
    %c0_i32_0 = arith.constant 0 : i32
    %c0_i32_1 = arith.constant 0 : i32
    return %c0_i32, %c0_i32_0 : i32, i32
  }
  func.func @transform_6(%arg0: i32) -> (i32, i32) {
    %c0_i32 = arith.constant 0 : i32
    %c0_i32_0 = arith.constant 0 : i32
    %c0_i32_1 = arith.constant 0 : i32
    return %c0_i32, %c0_i32_0 : i32, i32
  }
  func.func @transform_7(%arg0: i32) -> (i32, i32) {
    %c0_i32 = arith.constant 0 : i32
    %c0_i32_0 = arith.constant 0 : i32
    %c0_i32_1 = arith.constant 0 : i32
    return %c0_i32, %c0_i32_0 : i32, i32
  }
  func.func @transform_8(%arg0: i32) -> (i32, i32) {
    %c0_i32 = arith.constant 0 : i32
    %c0_i32_0 = arith.constant 0 : i32
    %c0_i32_1 = arith.constant 0 : i32
    return %c0_i32, %c0_i32_0 : i32, i32
  }
  func.func @transform_9(%arg0: i32) -> (i32, i32) {
    %c0_i32 = arith.constant 0 : i32
    %c0_i32_0 = arith.constant 0 : i32
    return %arg0, %c0_i32 : i32, i32
  }
}

</mosaic_0001>

<llo_original>
// kernel: tpu_custom_call.1
$region0: #{tpu_custom_call.1}
  #allocation0 [shape = 'u32[]', space=smem, size = 0x4, offset = 0x4, fixed_abs, tag = 'smem constant byte address 0x4 - core index']
  #allocation1 [shape = 'u32[144,128]{1,0:T(1,128)}', space=vmem, size = 0x12000, scoped, tag = 'internal scratch']
  %s0 = inlined_call_operand.hbm [shape: f32[16,128], index: 0, kind: input, shape index: {}]
  %s1 = inlined_call_operand.hbm [shape: f32[128,128], index: 1, kind: input, shape index: {}]
  %s2 = inlined_call_operand.vmem [shape: f32[1,128], index: 2, kind: input, shape index: {}]
  %s3 = inlined_call_operand.hbm [shape: f32[128,128], index: 3, kind: input, shape index: {}]
  %s4 = inlined_call_operand.vmem [shape: f32[1,128], index: 4, kind: input, shape index: {}]
  %s5 = inlined_call_operand.hbm [shape: f32[128,128], index: 5, kind: input, shape index: {}]
  %s6 = inlined_call_operand.vmem [shape: f32[1,128], index: 6, kind: input, shape index: {}]
  %s7 = inlined_call_operand.hbm [shape: f32[128,128], index: 7, kind: input, shape index: {}]
  %s8 = inlined_call_operand.vmem [shape: f32[1,128], index: 8, kind: input, shape index: {}]
  %s9 = inlined_call_operand.hbm [shape: f32[16,128], index: 9, kind: output, shape index: {}]
  %s10 = sld [smem:[#allocation0]]
  $region66: #{tpu_custom_call.1} parent=0
    _
  %s12 = ssub.s32 1, %s10
  %s13 = scalar_select 0, %s12, %s10
  $region1: #{tpu_custom_call.1} parent=0
    #allocation2 [shape = 'u8[8192]{0}', space=vmem, size = 0x2000, scoped, tag = 'input window, operand 0, single buffered']
    #allocation3 [shape = 's32[1]{0}', space=sflag, size = 0x4, scoped, tag = 'scoped memory for tpu_custom_call.1']
    #allocation4 [shape = 's32[1]{0}', space=sflag, size = 0x4, scoped, tag = 'scoped memory for tpu_custom_call.1']
    #allocation5 [shape = 'u8[65536]{0}', space=vmem, size = 0x10000, scoped, tag = 'input window, operand 1, single buffered']
    #allocation6 [shape = 's32[1]{0}', space=sflag, size = 0x4, scoped, tag = 'scoped memory for tpu_custom_call.1']
    #allocation7 [shape = 'u8[65536]{0}', space=vmem, size = 0x10000, scoped, tag = 'input window, operand 3, single buffered']
    #allocation8 [shape = 'u8[65536]{0}', space=vmem, size = 0x10000, scoped, tag = 'input window, operand 5, single buffered']
    #allocation9 [shape = 's32[1]{0}', space=sflag, size = 0x4, scoped, tag = 'scoped memory for tpu_custom_call.1']
    #allocation10 [shape = 'u8[65536]{0}', space=vmem, size = 0x10000, scoped, tag = 'input window, operand 7, single buffered']
    #allocation11 [shape = 'u8[8192]{0}', space=vmem, size = 0x2000, scoped, tag = 'output window, operand 0, single buffered']
    %14 = vsyncpa [#allocation3], 0
    %15 = vsyncpa [#allocation6], 0
    %16 = vsyncpa [#allocation9], 0
    %17 = vsyncpa [#allocation4], 0
    // Predicated region
    $region2: #{tpu_custom_call.1} parent=1 // pred_check
      _
    $region3: #{tpu_custom_call.1} parent=1 // pred_check_branch
      %19 = sbr.rel (0) target = $region5
    $region4: #{tpu_custom_call.1} parent=1 // pred_region
      %s21 = ssub.s32 256, 256
      %22 = vsyncadd [#allocation3], %s21
      %s23 = sshll.u32 [#allocation2], 4
      %s24 = int_to_ptr.vmem [resolvable:$true] %s23
      %29 = dma.hbm_to_vmem [thread:$0]  %s0, 256, %s24, [#allocation3], 128, 128, 8
    $region5: #{tpu_custom_call.1} parent=1 // pred_fallthru
      _
    // Predicated region
    $region6: #{tpu_custom_call.1} parent=1 // pred_check
      _
    $region7: #{tpu_custom_call.1} parent=1 // pred_check_branch
      %31 = sbr.rel (0) target = $region9
    $region8: #{tpu_custom_call.1} parent=1 // pred_region
      %s33 = ssub.s32 2048, 2048
      %34 = vsyncadd [#allocation6], %s33
      %s35 = sshll.u32 [#allocation5], 4
      %s36 = int_to_ptr.vmem [resolvable:$true] %s35
      %41 = dma.hbm_to_vmem [thread:$0]  %s1, 2048, %s36, [#allocation6], 128, 128, 8
    $region9: #{tpu_custom_call.1} parent=1 // pred_fallthru
      _
    // Predicated region
    $region10: #{tpu_custom_call.1} parent=1 // pred_check
      _
    $region11: #{tpu_custom_call.1} parent=1 // pred_check_branch
      %43 = sbr.rel (0) target = $region13
    $region12: #{tpu_custom_call.1} parent=1 // pred_region
      _
    $region13: #{tpu_custom_call.1} parent=1 // pred_fallthru
      _
    // Predicated region
    $region14: #{tpu_custom_call.1} parent=1 // pred_check
      _
    $region15: #{tpu_custom_call.1} parent=1 // pred_check_branch
      %45 = sbr.rel (0) target = $region17
    $region16: #{tpu_custom_call.1} parent=1 // pred_region
      %s47 = ssub.s32 2048, 2048
      %48 = vsyncadd [#allocation6], %s47
      %s49 = sshll.u32 [#allocation7], 4
      %s50 = int_to_ptr.vmem [resolvable:$true] %s49
      %55 = dma.hbm_to_vmem [thread:$0]  %s3, 2048, %s50, [#allocation6], 128, 128, 8
    $region17: #{tpu_custom_call.1} parent=1 // pred_fallthru
      _
    // Predicated region
    $region18: #{tpu_custom_call.1} parent=1 // pred_check
      _
    $region19: #{tpu_custom_call.1} parent=1 // pred_check_branch
      %57 = sbr.rel (0) target = $region21
    $region20: #{tpu_custom_call.1} parent=1 // pred_region
      _
    $region21: #{tpu_custom_call.1} parent=1 // pred_fallthru
      _
    // Predicated region
    $region22: #{tpu_custom_call.1} parent=1 // pred_check
      _
    $region23: #{tpu_custom_call.1} parent=1 // pred_check_branch
      %59 = sbr.rel (0) target = $region25
    $region24: #{tpu_custom_call.1} parent=1 // pred_region
      %s61 = ssub.s32 2048, 2048
      %62 = vsyncadd [#allocation9], %s61
      %s63 = sshll.u32 [#allocation8], 4
      %s64 = int_to_ptr.vmem [resolvable:$true] %s63
      %69 = dma.hbm_to_vmem [thread:$0]  %s5, 2048, %s64, [#allocation9], 128, 128, 8
    $region25: #{tpu_custom_call.1} parent=1 // pred_fallthru
      _
    // Predicated region
    $region26: #{tpu_custom_call.1} parent=1 // pred_check
      _
    $region27: #{tpu_custom_call.1} parent=1 // pred_check_branch
      %71 = sbr.rel (0) target = $region29
    $region28: #{tpu_custom_call.1} parent=1 // pred_region
      _
    $region29: #{tpu_custom_call.1} parent=1 // pred_fallthru
      _
    // Predicated region
    $region30: #{tpu_custom_call.1} parent=1 // pred_check
      _
    $region31: #{tpu_custom_call.1} parent=1 // pred_check_branch
      %73 = sbr.rel (0) target = $region33
    $region32: #{tpu_custom_call.1} parent=1 // pred_region
      %s75 = ssub.s32 2048, 2048
      %76 = vsyncadd [#allocation9], %s75
      %s77 = sshll.u32 [#allocation10], 4
      %s78 = int_to_ptr.vmem [resolvable:$true] %s77
      %83 = dma.hbm_to_vmem [thread:$0]  %s7, 2048, %s78, [#allocation9], 128, 128, 8
    $region33: #{tpu_custom_call.1} parent=1 // pred_fallthru
      _
    // Predicated region
    $region34: #{tpu_custom_call.1} parent=1 // pred_check
      _
    $region35: #{tpu_custom_call.1} parent=1 // pred_check_branch
      %85 = sbr.rel (0) target = $region37
    $region36: #{tpu_custom_call.1} parent=1 // pred_region
      _
    $region37: #{tpu_custom_call.1} parent=1 // pred_fallthru
      _
    // Predicated region
    $region38: #{tpu_custom_call.1} parent=1 // pred_check
      _
    $region39: #{tpu_custom_call.1} parent=1 // pred_check_branch
      %87 = sbr.rel (0) target = $region41
    $region40: #{tpu_custom_call.1} parent=1 // pred_region
      %88 = dma.done [#allocation3], 256
    $region41: #{tpu_custom_call.1} parent=1 // pred_fallthru
      _
    // Predicated region
    $region42: #{tpu_custom_call.1} parent=1 // pred_check
      _
    $region43: #{tpu_custom_call.1} parent=1 // pred_check_branch
      %90 = sbr.rel (0) target = $region45
    $region44: #{tpu_custom_call.1} parent=1 // pred_region
      %91 = dma.done [#allocation6], 2048
    $region45: #{tpu_custom_call.1} parent=1 // pred_fallthru
      _
    // Predicated region
    $region46: #{tpu_custom_call.1} parent=1 // pred_check
      _
    $region47: #{tpu_custom_call.1} parent=1 // pred_check_branch
      %93 = sbr.rel (0) target = $region49
    $region48: #{tpu_custom_call.1} parent=1 // pred_region
      %94 = dma.done [#allocation6], 2048
    $region49: #{tpu_custom_call.1} parent=1 // pred_fallthru
      _
    // Predicated region
    $region50: #{tpu_custom_call.1} parent=1 // pred_check
      _
    $region51: #{tpu_custom_call.1} parent=1 // pred_check_branch
      %96 = sbr.rel (0) target = $region53
    $region52: #{tpu_custom_call.1} parent=1 // pred_region
      %97 = dma.done [#allocation9], 2048
    $region53: #{tpu_custom_call.1} parent=1 // pred_fallthru
      _
    // Predicated region
    $region54: #{tpu_custom_call.1} parent=1 // pred_check
      _
    $region55: #{tpu_custom_call.1} parent=1 // pred_check_branch
      %99 = sbr.rel (0) target = $region57
    $region56: #{tpu_custom_call.1} parent=1 // pred_region
      %100 = dma.done [#allocation9], 2048
    $region57: #{tpu_custom_call.1} parent=1 // pred_fallthru
      _
    %v101 = vld [vmem:[#allocation2] sm:$0xff]
    %v102 = vld [vmem:[#allocation2 + $0x8] sm:$0xff]
    %v103 = vld [vmem:[#allocation5] sm:$0xff]
    %v104 = vld [vmem:[#allocation5 + $0x8] sm:$0xff]
    %v105 = vld [vmem:[#allocation5 + $0x10] sm:$0xff]
    %v106 = vld [vmem:[#allocation5 + $0x18] sm:$0xff]
    %v107 = vld [vmem:[#allocation5 + $0x20] sm:$0xff]
    %v108 = vld [vmem:[#allocation5 + $0x28] sm:$0xff]
    %v109 = vld [vmem:[#allocation5 + $0x30] sm:$0xff]
    %v110 = vld [vmem:[#allocation5 + $0x38] sm:$0xff]
    %v111 = vld [vmem:[#allocation5 + $0x40] sm:$0xff]
    %v112 = vld [vmem:[#allocation5 + $0x48] sm:$0xff]
    %v113 = vld [vmem:[#allocation5 + $0x50] sm:$0xff]
    %v114 = vld [vmem:[#allocation5 + $0x58] sm:$0xff]
    %v115 = vld [vmem:[#allocation5 + $0x60] sm:$0xff]
    %v116 = vld [vmem:[#allocation5 + $0x68] sm:$0xff]
    %v117 = vld [vmem:[#allocation5 + $0x70] sm:$0xff]
    %v118 = vld [vmem:[#allocation5 + $0x78] sm:$0xff]
    %v119 = vld [vmem:[%s2] sm:$0x1]
    %v121 = vlaneseq
    %v122 = vshrl.u32 %v121, 7
    %v123 = vsub.s32 0, %v122
    %v124 = vrot.slane %v119, %v123
    %126 = vmatprep.subr.mxu0 0.0
    %127 = vmatpush1.msra.mxu0 %v118
    %128 = vmatprep.subr.mxu0 0.0
    %129 = vmatpush1.msra.mxu0 %v117
    %130 = vmatprep.subr.mxu0 0.0
    %131 = vmatpush1.msra.mxu0 %v116
    %132 = vmatprep.subr.mxu0 0.0
    %133 = vmatpush1.msra.mxu0 %v115
    %134 = vmatprep.subr.mxu0 0.0
    %135 = vmatpush1.msra.mxu0 %v114
    %136 = vmatprep.subr.mxu0 0.0
    %137 = vmatpush1.msra.mxu0 %v113
    %138 = vmatprep.subr.mxu0 0.0
    %139 = vmatpush1.msra.mxu0 %v112
    %140 = vmatprep.subr.mxu0 0.0
    %141 = vmatpush1.msra.mxu0 %v111
    %142 = vmatprep.subr.mxu0 0.0
    %143 = vmatpush1.msra.mxu0 %v110
    %144 = vmatprep.subr.mxu0 0.0
    %145 = vmatpush1.msra.mxu0 %v109
    %146 = vmatprep.subr.mxu0 0.0
    %147 = vmatpush1.msra.mxu0 %v108
    %148 = vmatprep.subr.mxu0 0.0
    %149 = vmatpush1.msra.mxu0 %v107
    %150 = vmatprep.subr.mxu0 0.0
    %151 = vmatpush1.msra.mxu0 %v106
    %152 = vmatprep.subr.mxu0 0.0
    %153 = vmatpush1.msra.mxu0 %v105
    %154 = vmatprep.subr.mxu0 0.0
    %155 = vmatpush1.msra.mxu0 %v104
    %156 = vmatprep.subr.mxu0 0.0
    %157 = vmatpush1.msra.mxu0 %v103
    %158 = vmatprep.subr.mxu0 0.0
    %159 = vmatpush2.msra.mxu0 0.0
    %160 = vmatprep.subr.mxu0 0.0
    %161 = vmatpush2.msra.mxu0 0.0
    %162 = vmatprep.subr.mxu0 0.0
    %163 = vmatpush2.msra.mxu0 0.0
    %164 = vmatprep.subr.mxu0 0.0
    %165 = vmatpush2.msra.mxu0 0.0
    %166 = vmatprep.subr.mxu0 0.0
    %167 = vmatpush2.msra.mxu0 0.0
    %168 = vmatprep.subr.mxu0 0.0
    %169 = vmatpush2.msra.mxu0 0.0
    %170 = vmatprep.subr.mxu0 0.0
    %171 = vmatpush2.msra.mxu0 0.0
    %172 = vmatprep.subr.mxu0 0.0
    %173 = vmatpush2.msra.mxu0 0.0
    %174 = vmatprep.subr.mxu0 0.0
    %175 = vmatpush2.msra.mxu0 0.0
    %176 = vmatprep.subr.mxu0 0.0
    %177 = vmatpush2.msra.mxu0 0.0
    %178 = vmatprep.subr.mxu0 0.0
    %179 = vmatpush2.msra.mxu0 0.0
    %180 = vmatprep.subr.mxu0 0.0
    %181 = vmatpush2.msra.mxu0 0.0
    %182 = vmatprep.subr.mxu0 0.0
    %183 = vmatpush2.msra.mxu0 0.0
    %184 = vmatprep.subr.mxu0 0.0
    %185 = vmatpush2.msra.mxu0 0.0
    %186 = vmatprep.subr.mxu0 0.0
    %187 = vmatpush2.msra.mxu0 0.0
    %188 = vmatprep.subr.mxu0 0.0
    %189 = vmatpush2.msra.mxu0 0.0
    %190 = vmatprep.mubr.f32.mxu0 0.0
    %191 = vmatmul.mubr.f32.gmra.mxu0 %v101
    %v192 = vpop.f32.mrf.mxu0
    %v193 = vadd.f32 %v124, %v192
    %v194 = vpop.f32.mrf.mxu0
    %195 = vmatprep.mubr.f32.mxu0 0.0
    %196 = vmatmul.mubr.f32.gmra.mxu0 %v102
    %v197 = vpop.f32.mrf.mxu0
    %v198 = vadd.f32 %v124, %v197
    %v199 = vpop.f32.mrf.mxu0
    %200 = vdwg.mxu0
    %v201 = vld [vmem:[#allocation7] sm:$0xff]
    %v202 = vld [vmem:[#allocation7 + $0x8] sm:$0xff]
    %v203 = vld [vmem:[#allocation7 + $0x10] sm:$0xff]
    %v204 = vld [vmem:[#allocation7 + $0x18] sm:$0xff]
    %v205 = vld [vmem:[#allocation7 + $0x20] sm:$0xff]
    %v206 = vld [vmem:[#allocation7 + $0x28] sm:$0xff]
    %v207 = vld [vmem:[#allocation7 + $0x30] sm:$0xff]
    %v208 = vld [vmem:[#allocation7 + $0x38] sm:$0xff]
    %v209 = vld [vmem:[#allocation7 + $0x40] sm:$0xff]
    %v210 = vld [vmem:[#allocation7 + $0x48] sm:$0xff]
    %v211 = vld [vmem:[#allocation7 + $0x50] sm:$0xff]
    %v212 = vld [vmem:[#allocation7 + $0x58] sm:$0xff]
    %v213 = vld [vmem:[#allocation7 + $0x60] sm:$0xff]
    %v214 = vld [vmem:[#allocation7 + $0x68] sm:$0xff]
    %v215 = vld [vmem:[#allocation7 + $0x70] sm:$0xff]
    %v216 = vld [vmem:[#allocation7 + $0x78] sm:$0xff]
    %v217 = vld [vmem:[%s4] sm:$0x1]
    %v219 = vlaneseq
    %v220 = vshrl.u32 %v219, 7
    %v221 = vsub.s32 0, %v220
    %v222 = vrot.slane %v217, %v221
    %224 = vmatprep.subr.mxu0 0.0
    %225 = vmatpush1.msra.mxu0 %v216
    %226 = vmatprep.subr.mxu0 0.0
    %227 = vmatpush1.msra.mxu0 %v215
    %228 = vmatprep.subr.mxu0 0.0
    %229 = vmatpush1.msra.mxu0 %v214
    %230 = vmatprep.subr.mxu0 0.0
    %231 = vmatpush1.msra.mxu0 %v213
    %232 = vmatprep.subr.mxu0 0.0
    %233 = vmatpush1.msra.mxu0 %v212
    %234 = vmatprep.subr.mxu0 0.0
    %235 = vmatpush1.msra.mxu0 %v211
    %236 = vmatprep.subr.mxu0 0.0
    %237 = vmatpush1.msra.mxu0 %v210
    %238 = vmatprep.subr.mxu0 0.0
    %239 = vmatpush1.msra.mxu0 %v209
    %240 = vmatprep.subr.mxu0 0.0
    %241 = vmatpush1.msra.mxu0 %v208
    %242 = vmatprep.subr.mxu0 0.0
    %243 = vmatpush1.msra.mxu0 %v207
    %244 = vmatprep.subr.mxu0 0.0
    %245 = vmatpush1.msra.mxu0 %v206
    %246 = vmatprep.subr.mxu0 0.0
    %247 = vmatpush1.msra.mxu0 %v205
    %248 = vmatprep.subr.mxu0 0.0
    %249 = vmatpush1.msra.mxu0 %v204
    %250 = vmatprep.subr.mxu0 0.0
    %251 = vmatpush1.msra.mxu0 %v203
    %252 = vmatprep.subr.mxu0 0.0
    %253 = vmatpush1.msra.mxu0 %v202
    %254 = vmatprep.subr.mxu0 0.0
    %255 = vmatpush1.msra.mxu0 %v201
    %256 = vmatprep.subr.mxu0 0.0
    %257 = vmatpush2.msra.mxu0 0.0
    %258 = vmatprep.subr.mxu0 0.0
    %259 = vmatpush2.msra.mxu0 0.0
    %260 = vmatprep.subr.mxu0 0.0
    %261 = vmatpush2.msra.mxu0 0.0
    %262 = vmatprep.subr.mxu0 0.0
    %263 = vmatpush2.msra.mxu0 0.0
    %264 = vmatprep.subr.mxu0 0.0
    %265 = vmatpush2.msra.mxu0 0.0
    %266 = vmatprep.subr.mxu0 0.0
    %267 = vmatpush2.msra.mxu0 0.0
    %268 = vmatprep.subr.mxu0 0.0
    %269 = vmatpush2.msra.mxu0 0.0
    %270 = vmatprep.subr.mxu0 0.0
    %271 = vmatpush2.msra.mxu0 0.0
    %272 = vmatprep.subr.mxu0 0.0
    %273 = vmatpush2.msra.mxu0 0.0
    %274 = vmatprep.subr.mxu0 0.0
    %275 = vmatpush2.msra.mxu0 0.0
    %276 = vmatprep.subr.mxu0 0.0
    %277 = vmatpush2.msra.mxu0 0.0
    %278 = vmatprep.subr.mxu0 0.0
    %279 = vmatpush2.msra.mxu0 0.0
    %280 = vmatprep.subr.mxu0 0.0
    %281 = vmatpush2.msra.mxu0 0.0
    %282 = vmatprep.subr.mxu0 0.0
    %283 = vmatpush2.msra.mxu0 0.0
    %284 = vmatprep.subr.mxu0 0.0
    %285 = vmatpush2.msra.mxu0 0.0
    %286 = vmatprep.subr.mxu0 0.0
    %287 = vmatpush2.msra.mxu0 0.0
    %288 = vmatprep.mubr.f32.mxu0 0.0
    %289 = vmatmul.mubr.f32.gmra.mxu0 %v193
    %v290 = vpop.f32.mrf.mxu0
    %v291 = vadd.f32 %v222, %v290
    %v292 = vpop.f32.mrf.mxu0
    %293 = vmatprep.mubr.f32.mxu0 0.0
    %294 = vmatmul.mubr.f32.gmra.mxu0 %v198
    %v295 = vpop.f32.mrf.mxu0
    %v296 = vadd.f32 %v222, %v295
    %v297 = vpop.f32.mrf.mxu0
    %298 = vdwg.mxu0
    %vm299 = vcmp.gt.f32.partialorder %v291, 0.0
    %vm300 = vcmp.gt.f32.partialorder %v296, 0.0
    %v301 = vmul.f32 %v291, 0.01
    %v302 = vmul.f32 %v296, 0.01
    %v303 = vsel %vm299, %v291, %v301
    %v304 = vsel %vm300, %v296, %v302
    %v305 = vld [vmem:[#allocation8] sm:$0xff]
    %v306 = vld [vmem:[#allocation8 + $0x8] sm:$0xff]
    %v307 = vld [vmem:[#allocation8 + $0x10] sm:$0xff]
    %v308 = vld [vmem:[#allocation8 + $0x18] sm:$0xff]
    %v309 = vld [vmem:[#allocation8 + $0x20] sm:$0xff]
    %v310 = vld [vmem:[#allocation8 + $0x28] sm:$0xff]
    %v311 = vld [vmem:[#allocation8 + $0x30] sm:$0xff]
    %v312 = vld [vmem:[#allocation8 + $0x38] sm:$0xff]
    %v313 = vld [vmem:[#allocation8 + $0x40] sm:$0xff]
    %v314 = vld [vmem:[#allocation8 + $0x48] sm:$0xff]
    %v315 = vld [vmem:[#allocation8 + $0x50] sm:$0xff]
    %v316 = vld [vmem:[#allocation8 + $0x58] sm:$0xff]
    %v317 = vld [vmem:[#allocation8 + $0x60] sm:$0xff]
    %v318 = vld [vmem:[#allocation8 + $0x68] sm:$0xff]
    %v319 = vld [vmem:[#allocation8 + $0x70] sm:$0xff]
    %v320 = vld [vmem:[#allocation8 + $0x78] sm:$0xff]
    %v321 = vld [vmem:[%s6] sm:$0x1]
    %v323 = vlaneseq
    %v324 = vshrl.u32 %v323, 7
    %v325 = vsub.s32 0, %v324
    %v326 = vrot.slane %v321, %v325
    %328 = vmatprep.subr.mxu0 0.0
    %329 = vmatpush1.msra.mxu0 %v320
    %330 = vmatprep.subr.mxu0 0.0
    %331 = vmatpush1.msra.mxu0 %v319
    %332 = vmatprep.subr.mxu0 0.0
    %333 = vmatpush1.msra.mxu0 %v318
    %334 = vmatprep.subr.mxu0 0.0
    %335 = vmatpush1.msra.mxu0 %v317
    %336 = vmatprep.subr.mxu0 0.0
    %337 = vmatpush1.msra.mxu0 %v316
    %338 = vmatprep.subr.mxu0 0.0
    %339 = vmatpush1.msra.mxu0 %v315
    %340 = vmatprep.subr.mxu0 0.0
    %341 = vmatpush1.msra.mxu0 %v314
    %342 = vmatprep.subr.mxu0 0.0
    %343 = vmatpush1.msra.mxu0 %v313
    %344 = vmatprep.subr.mxu0 0.0
    %345 = vmatpush1.msra.mxu0 %v312
    %346 = vmatprep.subr.mxu0 0.0
    %347 = vmatpush1.msra.mxu0 %v311
    %348 = vmatprep.subr.mxu0 0.0
    %349 = vmatpush1.msra.mxu0 %v310
    %350 = vmatprep.subr.mxu0 0.0
    %351 = vmatpush1.msra.mxu0 %v309
    %352 = vmatprep.subr.mxu0 0.0
    %353 = vmatpush1.msra.mxu0 %v308
    %354 = vmatprep.subr.mxu0 0.0
    %355 = vmatpush1.msra.mxu0 %v307
    %356 = vmatprep.subr.mxu0 0.0
    %357 = vmatpush1.msra.mxu0 %v306
    %358 = vmatprep.subr.mxu0 0.0
    %359 = vmatpush1.msra.mxu0 %v305
    %360 = vmatprep.subr.mxu0 0.0
    %361 = vmatpush2.msra.mxu0 0.0
    %362 = vmatprep.subr.mxu0 0.0
    %363 = vmatpush2.msra.mxu0 0.0
    %364 = vmatprep.subr.mxu0 0.0
    %365 = vmatpush2.msra.mxu0 0.0
    %366 = vmatprep.subr.mxu0 0.0
    %367 = vmatpush2.msra.mxu0 0.0
    %368 = vmatprep.subr.mxu0 0.0
    %369 = vmatpush2.msra.mxu0 0.0
    %370 = vmatprep.subr.mxu0 0.0
    %371 = vmatpush2.msra.mxu0 0.0
    %372 = vmatprep.subr.mxu0 0.0
    %373 = vmatpush2.msra.mxu0 0.0
    %374 = vmatprep.subr.mxu0 0.0
    %375 = vmatpush2.msra.mxu0 0.0
    %376 = vmatprep.subr.mxu0 0.0
    %377 = vmatpush2.msra.mxu0 0.0
    %378 = vmatprep.subr.mxu0 0.0
    %379 = vmatpush2.msra.mxu0 0.0
    %380 = vmatprep.subr.mxu0 0.0
    %381 = vmatpush2.msra.mxu0 0.0
    %382 = vmatprep.subr.mxu0 0.0
    %383 = vmatpush2.msra.mxu0 0.0
    %384 = vmatprep.subr.mxu0 0.0
    %385 = vmatpush2.msra.mxu0 0.0
    %386 = vmatprep.subr.mxu0 0.0
    %387 = vmatpush2.msra.mxu0 0.0
    %388 = vmatprep.subr.mxu0 0.0
    %389 = vmatpush2.msra.mxu0 0.0
    %390 = vmatprep.subr.mxu0 0.0
    %391 = vmatpush2.msra.mxu0 0.0
    %392 = vmatprep.mubr.f32.mxu0 0.0
    %393 = vmatmul.mubr.f32.gmra.mxu0 %v303
    %v394 = vpop.f32.mrf.mxu0
    %v395 = vadd.f32 %v326, %v394
    %v396 = vpop.f32.mrf.mxu0
    %397 = vmatprep.mubr.f32.mxu0 0.0
    %398 = vmatmul.mubr.f32.gmra.mxu0 %v304
    %v399 = vpop.f32.mrf.mxu0
    %v400 = vadd.f32 %v326, %v399
    %v401 = vpop.f32.mrf.mxu0
    %402 = vdwg.mxu0
    %vm403 = vcmp.gt.f32.partialorder %v395, 0.0
    %vm404 = vcmp.gt.f32.partialorder %v400, 0.0
    %v405 = vmul.f32 %v395, 0.01
    %v406 = vmul.f32 %v400, 0.01
    %v407 = vsel %vm403, %v395, %v405
    %v408 = vsel %vm404, %v400, %v406
    %v409 = vld [vmem:[#allocation10] sm:$0xff]
    %v410 = vld [vmem:[#allocation10 + $0x8] sm:$0xff]
    %v411 = vld [vmem:[#allocation10 + $0x10] sm:$0xff]
    %v412 = vld [vmem:[#allocation10 + $0x18] sm:$0xff]
    %v413 = vld [vmem:[#allocation10 + $0x20] sm:$0xff]
    %v414 = vld [vmem:[#allocation10 + $0x28] sm:$0xff]
    %v415 = vld [vmem:[#allocation10 + $0x30] sm:$0xff]
    %v416 = vld [vmem:[#allocation10 + $0x38] sm:$0xff]
    %v417 = vld [vmem:[#allocation10 + $0x40] sm:$0xff]
    %v418 = vld [vmem:[#allocation10 + $0x48] sm:$0xff]
    %v419 = vld [vmem:[#allocation10 + $0x50] sm:$0xff]
    %v420 = vld [vmem:[#allocation10 + $0x58] sm:$0xff]
    %v421 = vld [vmem:[#allocation10 + $0x60] sm:$0xff]
    %v422 = vld [vmem:[#allocation10 + $0x68] sm:$0xff]
    %v423 = vld [vmem:[#allocation10 + $0x70] sm:$0xff]
    %v424 = vld [vmem:[#allocation10 + $0x78] sm:$0xff]
    %v425 = vld [vmem:[%s8] sm:$0x1]
    %v427 = vlaneseq
    %v428 = vshrl.u32 %v427, 7
    %v429 = vsub.s32 0, %v428
    %v430 = vrot.slane %v425, %v429
    %432 = vmatprep.subr.mxu0 0.0
    %433 = vmatpush1.msra.mxu0 %v424
    %434 = vmatprep.subr.mxu0 0.0
    %435 = vmatpush1.msra.mxu0 %v423
    %436 = vmatprep.subr.mxu0 0.0
    %437 = vmatpush1.msra.mxu0 %v422
    %438 = vmatprep.subr.mxu0 0.0
    %439 = vmatpush1.msra.mxu0 %v421
    %440 = vmatprep.subr.mxu0 0.0
    %441 = vmatpush1.msra.mxu0 %v420
    %442 = vmatprep.subr.mxu0 0.0
    %443 = vmatpush1.msra.mxu0 %v419
    %444 = vmatprep.subr.mxu0 0.0
    %445 = vmatpush1.msra.mxu0 %v418
    %446 = vmatprep.subr.mxu0 0.0
    %447 = vmatpush1.msra.mxu0 %v417
    %448 = vmatprep.subr.mxu0 0.0
    %449 = vmatpush1.msra.mxu0 %v416
    %450 = vmatprep.subr.mxu0 0.0
    %451 = vmatpush1.msra.mxu0 %v415
    %452 = vmatprep.subr.mxu0 0.0
    %453 = vmatpush1.msra.mxu0 %v414
    %454 = vmatprep.subr.mxu0 0.0
    %455 = vmatpush1.msra.mxu0 %v413
    %456 = vmatprep.subr.mxu0 0.0
    %457 = vmatpush1.msra.mxu0 %v412
    %458 = vmatprep.subr.mxu0 0.0
    %459 = vmatpush1.msra.mxu0 %v411
    %460 = vmatprep.subr.mxu0 0.0
    %461 = vmatpush1.msra.mxu0 %v410
    %462 = vmatprep.subr.mxu0 0.0
    %463 = vmatpush1.msra.mxu0 %v409
    %464 = vmatprep.subr.mxu0 0.0
    %465 = vmatpush2.msra.mxu0 0.0
    %466 = vmatprep.subr.mxu0 0.0
    %467 = vmatpush2.msra.mxu0 0.0
    %468 = vmatprep.subr.mxu0 0.0
    %469 = vmatpush2.msra.mxu0 0.0
    %470 = vmatprep.subr.mxu0 0.0
    %471 = vmatpush2.msra.mxu0 0.0
    %472 = vmatprep.subr.mxu0 0.0
    %473 = vmatpush2.msra.mxu0 0.0
    %474 = vmatprep.subr.mxu0 0.0
    %475 = vmatpush2.msra.mxu0 0.0
    %476 = vmatprep.subr.mxu0 0.0
    %477 = vmatpush2.msra.mxu0 0.0
    %478 = vmatprep.subr.mxu0 0.0
    %479 = vmatpush2.msra.mxu0 0.0
    %480 = vmatprep.subr.mxu0 0.0
    %481 = vmatpush2.msra.mxu0 0.0
    %482 = vmatprep.subr.mxu0 0.0
    %483 = vmatpush2.msra.mxu0 0.0
    %484 = vmatprep.subr.mxu0 0.0
    %485 = vmatpush2.msra.mxu0 0.0
    %486 = vmatprep.subr.mxu0 0.0
    %487 = vmatpush2.msra.mxu0 0.0
    %488 = vmatprep.subr.mxu0 0.0
    %489 = vmatpush2.msra.mxu0 0.0
    %490 = vmatprep.subr.mxu0 0.0
    %491 = vmatpush2.msra.mxu0 0.0
    %492 = vmatprep.subr.mxu0 0.0
    %493 = vmatpush2.msra.mxu0 0.0
    %494 = vmatprep.subr.mxu0 0.0
    %495 = vmatpush2.msra.mxu0 0.0
    %496 = vmatprep.mubr.f32.mxu0 0.0
    %497 = vmatmul.mubr.f32.gmra.mxu0 %v407
    %v498 = vpop.f32.mrf.mxu0
    %v499 = vadd.f32 %v430, %v498
    %v500 = vpop.f32.mrf.mxu0
    %501 = vmatprep.mubr.f32.mxu0 0.0
    %502 = vmatmul.mubr.f32.gmra.mxu0 %v408
    %v503 = vpop.f32.mrf.mxu0
    %v504 = vadd.f32 %v430, %v503
    %v505 = vpop.f32.mrf.mxu0
    %506 = vdwg.mxu0
    %v507 = vtanh.pop %v499
    %v508 = vtanh.pop %v504
    %509 = vst [vmem:[#allocation11] sm:$0xff] %v507
    %510 = vst [vmem:[#allocation11 + $0x8] sm:$0xff] %v508
    // Predicated region
    $region58: #{tpu_custom_call.1} parent=1 // pred_check
      _
    $region59: #{tpu_custom_call.1} parent=1 // pred_check_branch
      %512 = sbr.rel (0) target = $region61
    $region60: #{tpu_custom_call.1} parent=1 // pred_region
      %s514 = ssub.s32 256, 256
      %515 = vsyncadd [#allocation4], %s514
      %s516 = sshll.u32 [#allocation11], 4
      %s517 = int_to_ptr.vmem [resolvable:$true] %s516
      %522 = dma.vmem_to_hbm [thread:$0]  %s517, 256, %s9, [#allocation4], 128, 128, 8
    $region61: #{tpu_custom_call.1} parent=1 // pred_fallthru
      _
    // Predicated region
    $region62: #{tpu_custom_call.1} parent=1 // pred_check
      _
    $region63: #{tpu_custom_call.1} parent=1 // pred_check_branch
      %524 = sbr.rel (0) target = $region65
    $region64: #{tpu_custom_call.1} parent=1 // pred_region
      %525 = dma.done [#allocation4], 256
    $region65: #{tpu_custom_call.1} parent=1 // pred_fallthru
      _
    %526 = vsyncpa [#allocation3], 1
    %527 = vsyncpa [#allocation6], 1
    %528 = vsyncpa [#allocation9], 1
    %529 = vsyncpa [#allocation4], 1

</llo_original>
